<compile_context>
chip_gen: v7x
topology: tpu7x:2x2x1
jax: 0.10.0
libtpu: 0.0.40
codegen_flags: <defaults>
</compile_context>

<pallas_src>
import jax
import jax.numpy as jnp
from jax.experimental import pallas as pl
from jax.experimental.pallas import tpu as pltpu
import numpy as np

_LANE = 128
_SUBLANE = 8


def _round_up(x, m):
    return ((x + m - 1) // m) * m


def _embed_kernel(p_ref, w_ref, pe_ref, o_ref):
    # p_ref : (tile_m, Kp) compute dtype   -- patch rows for this grid step
    # w_ref : (Kp, Hp)     compute dtype   -- resident across all grid steps
    # pe_ref: (tile_m, Hp) float32         -- pos_emb + conv bias, resident
    # o_ref : (tile_m, Hp) output dtype
    acc = jnp.dot(p_ref[...], w_ref[...], preferred_element_type=jnp.float32)
    o_ref[...] = (acc + pe_ref[...]).astype(o_ref.dtype)


def _pick_batches_per_block(B, n_patches, per_row_bytes, fixed_bytes,
                            vmem_budget, target_rows=512):
    """How many batch elements go into one M-block of the grid."""
    valid = []
    for d in range(1, B + 1):
        if B % d:
            continue
        rows = d * n_patches
        if rows % _SUBLANE != 0 and d != B:     # (8,128) tiling constraint
            continue
        if fixed_bytes + rows * per_row_bytes > vmem_budget and d != 1:
            continue
        valid.append(d)
    if not valid:
        # fall back to a legal layout: 1 if n_patches is sublane-aligned,
        # otherwise the full batch (block == full array extent is always legal)
        return 1 if n_patches % _SUBLANE == 0 else B
    # keep >=2 grid steps when the batch allows it (megacore sharding on v7x)
    multi = [d for d in valid if B // d >= 2]
    pool = multi if multi else valid
    # largest block whose row count stays at/below the target (~512 rows)
    small = [d for d in pool if d * n_patches <= target_rows]
    return max(small) if small else min(pool)


def embeddings_forward(features, conv_w, conv_b, pos_emb, *, patch_size,
                       compute_dtype=jnp.bfloat16):
    """features: (B, C, H, W) or (B, C, D, H, W).
    conv_w: (hidden, C, *patch_size).  conv_b: (hidden,).
    pos_emb: (1, n_patches, hidden).  Returns (B, n_patches, hidden)."""
    patch_size = tuple(int(p) for p in patch_size)
    nd = len(patch_size)
    B, C = features.shape[0], features.shape[1]
    spatial = features.shape[2:]
    assert len(spatial) == nd, "patch_size rank must match spatial rank"
    hid = conv_w.shape[0]
    grids = tuple(s // p for s, p in zip(spatial, patch_size))
    n_patches = int(np.prod(grids))
    K = C * int(np.prod(patch_size))
    M = B * n_patches

    Kp = _round_up(K, _LANE)
    Hp = _round_up(hid, _LANE)

    out_dtype = features.dtype
    cbytes = jnp.dtype(compute_dtype).itemsize
    obytes = jnp.dtype(out_dtype).itemsize

    # --- VMEM budget (v7x has 64 MiB per TC vs 128 MiB on v5e/v6e).
    try:
        vmem_cap = int(pltpu.get_tpu_info().vmem_capacity_bytes)
    except Exception:
        vmem_cap = 64 * 1024 * 1024
    vmem_budget = vmem_cap // 2

    # per grid step: 2x double-buffered patch tile + 2x output tile + pe tile
    per_row = 2 * Kp * cbytes + 2 * Hp * obytes + Hp * 4
    fixed = Kp * Hp * cbytes                       # resident weights
    bpt = _pick_batches_per_block(B, n_patches, per_row, fixed, vmem_budget)
    tile_m = bpt * n_patches
    grid = (M // tile_m,)

    # --- host-side glue (fused by XLA when this wrapper is jitted).
    # Cast to the compute dtype *before* the patch-extraction transpose so the
    # extra HBM pass moves half the bytes for bf16.
    x = features.astype(compute_dtype)
    shape = (B, C) + tuple(v for gp in zip(grids, patch_size) for v in gp)
    x = x.reshape(shape)
    perm = ((0,) + tuple(2 + 2 * i for i in range(nd))
            + (1,) + tuple(3 + 2 * i for i in range(nd)))
    patches = x.transpose(perm).reshape(M, K)
    if Kp != K:
        patches = jnp.pad(patches, ((0, 0), (0, Kp - K)))         # (M, Kp)

    w2d = conv_w.reshape(hid, K).T.astype(compute_dtype)          # (K, hid)
    if (Kp, Hp) != (K, hid):
        w2d = jnp.pad(w2d, ((0, Kp - K), (0, Hp - hid)))          # (Kp, Hp)

    # Fold the conv bias into the position embedding; keep the epilogue in f32.
    pe = (pos_emb.reshape(n_patches, hid).astype(jnp.float32)
          + conv_b.astype(jnp.float32).reshape(1, hid))
    if Hp != hid:
        pe = jnp.pad(pe, ((0, 0), (0, Hp - hid)))                 # (N, Hp)
    pe_tile = jnp.tile(pe, (bpt, 1)) if bpt > 1 else pe           # (tile_m, Hp)

    cost = pl.CostEstimate(
        flops=2 * M * Kp * Hp,
        transcendentals=0,
        bytes_accessed=(patches.size * cbytes + w2d.size * cbytes
                        + pe_tile.size * 4 + M * Hp * obytes))

    out = pl.pallas_call(
        _embed_kernel,
        out_shape=jax.ShapeDtypeStruct((M, Hp), out_dtype),
        grid_spec=pltpu.PrefetchScalarGridSpec(
            num_scalar_prefetch=0,
            grid=grid,
            in_specs=[
                pl.BlockSpec((tile_m, Kp), lambda i: (i, 0)),
                pl.BlockSpec((Kp, Hp), lambda i: (0, 0)),      # resident W
                pl.BlockSpec((tile_m, Hp), lambda i: (0, 0)),  # resident pos_emb
            ],
            out_specs=pl.BlockSpec((tile_m, Hp), lambda i: (i, 0)),
        ),
        compiler_params=pltpu.CompilerParams(
            dimension_semantics=("parallel",),
            vmem_limit_bytes=int(vmem_budget)),
        cost_estimate=cost,
    )(patches, w2d, pe_tile)

    out = out.reshape(B, n_patches, Hp)
    if Hp != hid:
        out = out[:, :, :hid]
    return out


def _reference(features, conv_w, conv_b, pos_emb, patch_size):
    # pure-JAX reference using lax.conv (strided, non-overlapping patches)
    nd = len(patch_size)
    dn = (("NCHW", "OIHW", "NCHW") if nd == 2
          else ("NCDHW", "OIDHW", "NCDHW"))
    y = jax.lax.conv_general_dilated(
        features, conv_w,
        window_strides=patch_size, padding="VALID",
        dimension_numbers=dn)
    y = y + conv_b.reshape((1, -1) + (1,) * nd)
    B, hid = y.shape[0], y.shape[1]
    y = y.reshape(B, hid, -1).transpose(0, 2, 1)   # (B, N, hidden)
    return y + pos_emb


if __name__ == "__main__":
    fwd = jax.jit(embeddings_forward,
                  static_argnames=("patch_size", "compute_dtype"))
    key = jax.random.PRNGKey(0)

    # ---------- 2-D case: feature_size=(16,16), patch=(4,4), C=4, hidden=32
    B, C, H, W = 2, 4, 16, 16
    patch_size = (4, 4)
    hidden = 32
    n_patches = (H // patch_size[0]) * (W // patch_size[1])

    k1, k2, k3, k4, k5, k6 = jax.random.split(key, 6)
    features = jax.random.normal(k1, (B, C, H, W), dtype=jnp.float32)
    fan_in = C * patch_size[0] * patch_size[1]
    conv_w = jax.random.normal(k2, (hidden, C, *patch_size),
                               dtype=jnp.float32) / np.sqrt(fan_in)
    conv_b = jax.random.normal(k3, (hidden,), dtype=jnp.float32) * 0.01
    pos_emb = 0.2 * jax.random.truncated_normal(
        k4, -2.0, 2.0, (1, n_patches, hidden), dtype=jnp.float32)

    # exact path: f32 MXU inputs, tight tolerance vs the conv reference
    out_f32 = jax.block_until_ready(
        fwd(features, conv_w, conv_b, pos_emb,
            patch_size=patch_size, compute_dtype=jnp.float32))
    ref = _reference(features, conv_w, conv_b, pos_emb, patch_size)
    np.testing.assert_allclose(np.asarray(out_f32), np.asarray(ref),
                               rtol=1e-5, atol=1e-5)

    # fast path (default): bf16 MXU inputs with f32 accumulation / epilogue
    out_bf16 = jax.block_until_ready(
        fwd(features, conv_w, conv_b, pos_emb, patch_size=patch_size))
    ref_bf16 = _reference(
        features.astype(jnp.bfloat16).astype(jnp.float32),
        conv_w.astype(jnp.bfloat16).astype(jnp.float32),
        conv_b, pos_emb, patch_size)
    np.testing.assert_allclose(np.asarray(out_bf16), np.asarray(ref_bf16),
                               rtol=2e-3, atol=2e-3)

    # ---------- 3-D case: feature_size=(8,8,8), patch=(2,2,2), C=4, hidden=32
    patch3 = (2, 2, 2)
    D3 = H3 = W3 = 8
    n_patches3 = (D3 // 2) * (H3 // 2) * (W3 // 2)
    features3 = jax.random.normal(k5, (B, C, D3, H3, W3), dtype=jnp.float32)
    fan_in3 = C * int(np.prod(patch3))
    conv_w3 = jax.random.normal(k6, (hidden, C, *patch3),
                                dtype=jnp.float32) / np.sqrt(fan_in3)
    conv_b3 = conv_b
    pos_emb3 = 0.2 * jax.random.truncated_normal(
        k4, -2.0, 2.0, (1, n_patches3, hidden), dtype=jnp.float32)

    out3 = jax.block_until_ready(
        fwd(features3, conv_w3, conv_b3, pos_emb3,
            patch_size=patch3, compute_dtype=jnp.float32))
    ref3 = _reference(features3, conv_w3, conv_b3, pos_emb3, patch3)
    np.testing.assert_allclose(np.asarray(out3), np.asarray(ref3),
                               rtol=1e-4, atol=1e-4)

    print("KERNEL_OK")
</pallas_src>

<mosaic_0001>
module attributes {stable_mosaic.version = 11 : i64} {
  func.func @_embed_kernel(%arg0: i32, %arg1: memref<16x128xf32, #tpu.memory_space<vmem>>, %arg2: memref<128x128xf32, #tpu.memory_space<vmem>>, %arg3: memref<16x128xf32, #tpu.memory_space<vmem>>, %arg4: memref<16x128xf32, #tpu.memory_space<vmem>>) attributes {dimension_semantics = [#tpu.dimension_semantics<parallel>], iteration_bounds = array<i64: 2>, scalar_prefetch = 0 : i64, scratch_operands = 0 : i64, tpu.core_type = #tpu.core_type<tc>, window_params = [{transform_indices = @transform_0, window_bounds = array<i64: 16, 128>}, {pipeline_mode = #tpu.pipeline_mode<synchronous>, transform_indices = @transform_1, window_bounds = array<i64: 128, 128>}, {pipeline_mode = #tpu.pipeline_mode<synchronous>, transform_indices = @transform_2, window_bounds = array<i64: 16, 128>}, {transform_indices = @transform_3, window_bounds = array<i64: 16, 128>}]} {
    %c0 = arith.constant 0 : index
    %c0_0 = arith.constant 0 : index
    %0 = vector.load %arg1[%c0, %c0_0] : memref<16x128xf32, #tpu.memory_space<vmem>>, vector<16x128xf32>
    %c0_1 = arith.constant 0 : index
    %c0_2 = arith.constant 0 : index
    %1 = vector.load %arg2[%c0_1, %c0_2] : memref<128x128xf32, #tpu.memory_space<vmem>>, vector<128x128xf32>
    %cst = arith.constant dense<0.000000e+00> : vector<16x128xf32>
    %2 = tpu.matmul %0, %1, %cst {dimension_numbers = #tpu.dot_dimension_numbers<[1], [0], [0], [1], [0, 0, 1, 1], [], []>} : vector<16x128xf32>, vector<128x128xf32>, vector<16x128xf32> -> vector<16x128xf32>
    %c0_3 = arith.constant 0 : index
    %c0_4 = arith.constant 0 : index
    %3 = vector.load %arg3[%c0_3, %c0_4] : memref<16x128xf32, #tpu.memory_space<vmem>>, vector<16x128xf32>
    %4 = arith.addf %2, %3 : vector<16x128xf32>
    %c0_5 = arith.constant 0 : index
    %c0_6 = arith.constant 0 : index
    %5 = vector.load %arg4[%c0_5, %c0_6] : memref<16x128xf32, #tpu.memory_space<vmem>>, vector<16x128xf32>
    tpu.vector_store %arg4[%c0_5, %c0_6], %4 {strides = array<i32>} : memref<16x128xf32, #tpu.memory_space<vmem>>, vector<16x128xf32>,
    return
  }
  func.func @transform_0(%arg0: i32) -> (i32, i32) {
    %c0_i32 = arith.constant 0 : i32
    %c0_i32_0 = arith.constant 0 : i32
    return %arg0, %c0_i32 : i32, i32
  }
  func.func @transform_1(%arg0: i32) -> (i32, i32) {
    %c0_i32 = arith.constant 0 : i32
    %c0_i32_0 = arith.constant 0 : i32
    %c0_i32_1 = arith.constant 0 : i32
    return %c0_i32, %c0_i32_0 : i32, i32
  }
  func.func @transform_2(%arg0: i32) -> (i32, i32) {
    %c0_i32 = arith.constant 0 : i32
    %c0_i32_0 = arith.constant 0 : i32
    %c0_i32_1 = arith.constant 0 : i32
    return %c0_i32, %c0_i32_0 : i32, i32
  }
  func.func @transform_3(%arg0: i32) -> (i32, i32) {
    %c0_i32 = arith.constant 0 : i32
    %c0_i32_0 = arith.constant 0 : i32
    return %arg0, %c0_i32 : i32, i32
  }
}

</mosaic_0001>

<llo_original>
// kernel: embeddings_forward.1
$region0: #{embeddings_forward.1}
  #allocation0 [shape = 'u32[]', space=smem, size = 0x4, offset = 0x4, fixed_abs, tag = 'smem constant byte address 0x4 - core index']
  #allocation1 [shape = 'u32[144,128]{1,0:T(1,128)}', space=vmem, size = 0x12000, scoped, tag = 'internal scratch']
  %s0 = inlined_call_operand.vmem [shape: f32[32,128], index: 0, kind: input, shape index: {}]
  %s1 = inlined_call_operand.vmem [shape: f32[128,128], index: 1, kind: input, shape index: {}]
  %s2 = inlined_call_operand.vmem [shape: f32[16,128], index: 2, kind: input, shape index: {}]
  %s3 = inlined_call_operand.hbm [shape: f32[32,128], index: 3, kind: output, shape index: {}]
  %s4 = sld [smem:[#allocation0]]
  $region45: #{embeddings_forward.1} parent=0
    _
  %s6 = ssub.s32 1, %s4
  %s7 = scalar_select 0, %s6, %s4
  $region1: #{embeddings_forward.1} parent=0
    #allocation2 [shape = 'u8[16384]{0}', space=vmem, size = 0x4000, scoped, tag = 'output window, operand 0']
    #allocation3 [shape = 's32[2]{0}', space=sflag, size = 0x8, scoped, tag = 'scoped memory for embeddings_forward.1']
    %8 = vsyncpa [#allocation3], 0
    %s9 = scalar_lea.sflag [#allocation3], 1
    %10 = vsyncpa %s9, 0
    loop: start=0, step=1, limit=4
    $region2: #{embeddings_forward.1} parent=1 // loop_pre_header
      _
    $region3: #{embeddings_forward.1} parent=1 // loop_header
      %s12 = sphi 0, %s16
      %p13 = scmp.ge.s32.totalorder %s12, 4
      %s22 = sphi 0, %s24
      %s25 = sphi 0, %s22
      %s26 = sphi 0, %s25
      %s42 = sphi 0, %s26
      %s46 = sphi 0, %s46
      %s48 = sphi 0, %s46
      %s49 = sphi 0, %s48
      %s63 = sphi 0, %s49
      %s67 = sphi 0, %s67
      %s69 = sphi 0, %s67
      %s70 = sphi 0, %s69
      %s84 = sphi 0, %s70
      %s90 = sphi 0, %s92
      %s93 = sphi 0, %s90
      %s94 = sphi 0, %s93
      %s110 = sphi 0, %s94
    $region4: #{embeddings_forward.1} parent=1 // loop_header_branch
      %15 = sbr.rel (%p13) target = $region8
    $region5: #{embeddings_forward.1} parent=1 // loop_body
      %s17 = ssub.s32 %s12, 1
      %s18 = ssub.s32 %s12, 2
      %s19 = sadd.s32 %s12, 1
      %s20 = ssub.s32 %s12, %s19
      %p21 = scmp.eq.s32.totalorder %s20, 0
      %s23 = sadd.s32 %s22, 1
      %s24 = scalar_select %p21, %s22, %s23
      %p27 = pneg %p21
      %p28 = scmp.eq.s32.totalorder %s12, 1
      %p29 = por %p27, %p28
      %p30 = scmp.ne.s32.totalorder %s22, %s25
      %p31 = scmp.eq.s32.totalorder %s12, 0
      %p32 = por %p30, %p31
      %p33 = scmp.ne.s32.totalorder %s22, %s25
      %p34 = scmp.eq.s32.totalorder %s17, 1
      %p35 = por %p33, %p34
      %p36 = scmp.ne.s32.totalorder %s25, %s26
      %p37 = scmp.eq.s32.totalorder %s17, 0
      %p38 = por %p36, %p37
      %p39 = scmp.ne.s32.totalorder %s25, %s26
      %p40 = scmp.eq.s32.totalorder %s18, 1
      %p41 = por %p39, %p40
      %p43 = scmp.ne.s32.totalorder %s26, %s42
      %p44 = scmp.eq.s32.totalorder %s18, 0
      %p45 = por %p43, %p44
      %s47 = sadd.s32 %s46, 1
      %p50 = scmp.eq.s32.totalorder %s12, 1
      %p51 = scmp.ne.s32.totalorder %s46, %s48
      %p52 = scmp.eq.s32.totalorder %s12, 0
      %p53 = por %p51, %p52
      %p54 = scmp.ne.s32.totalorder %s46, %s48
      %p55 = scmp.eq.s32.totalorder %s17, 1
      %p56 = por %p54, %p55
      %p57 = scmp.ne.s32.totalorder %s48, %s49
      %p58 = scmp.eq.s32.totalorder %s17, 0
      %p59 = por %p57, %p58
      %p60 = scmp.ne.s32.totalorder %s48, %s49
      %p61 = scmp.eq.s32.totalorder %s18, 1
      %p62 = por %p60, %p61
      %p64 = scmp.ne.s32.totalorder %s49, %s63
      %p65 = scmp.eq.s32.totalorder %s18, 0
      %p66 = por %p64, %p65
      %s68 = sadd.s32 %s67, 1
      %p71 = scmp.eq.s32.totalorder %s12, 1
      %p72 = scmp.ne.s32.totalorder %s67, %s69
      %p73 = scmp.eq.s32.totalorder %s12, 0
      %p74 = por %p72, %p73
      %p75 = scmp.ne.s32.totalorder %s67, %s69
      %p76 = scmp.eq.s32.totalorder %s17, 1
      %p77 = por %p75, %p76
      %p78 = scmp.ne.s32.totalorder %s69, %s70
      %p79 = scmp.eq.s32.totalorder %s17, 0
      %p80 = por %p78, %p79
      %p81 = scmp.ne.s32.totalorder %s69, %s70
      %p82 = scmp.eq.s32.totalorder %s18, 1
      %p83 = por %p81, %p82
      %p85 = scmp.ne.s32.totalorder %s70, %s84
      %p86 = scmp.eq.s32.totalorder %s18, 0
      %p87 = por %p85, %p86
      %s88 = ssub.s32 %s12, %s19
      %p89 = scmp.eq.s32.totalorder %s88, 0
      %s91 = sadd.s32 %s90, 1
      %s92 = scalar_select %p89, %s90, %s91
      %p95 = pneg %p89
      %p96 = scmp.eq.s32.totalorder %s12, 1
      %p97 = por %p95, %p96
      %p98 = scmp.ne.s32.totalorder %s90, %s93
      %p99 = scmp.eq.s32.totalorder %s12, 0
      %p100 = por %p98, %p99
      %p101 = scmp.ne.s32.totalorder %s90, %s93
      %p102 = scmp.eq.s32.totalorder %s17, 1
      %p103 = por %p101, %p102
      %p104 = scmp.ne.s32.totalorder %s93, %s94
      %p105 = scmp.eq.s32.totalorder %s17, 0
      %p106 = por %p104, %p105
      %p107 = scmp.ne.s32.totalorder %s93, %s94
      %p108 = scmp.eq.s32.totalorder %s18, 1
      %p109 = por %p107, %p108
      %p111 = scmp.ne.s32.totalorder %s94, %s110
      %p112 = scmp.eq.s32.totalorder %s18, 0
      %p113 = por %p111, %p112
      %p114 = scmp.le.s32.totalorder 1, %s12
      %p115 = scmp.lt.s32.totalorder %s12, 3
      %p116 = pnand %p114, %p115
      %p117 = pneg %p116
      // Predicated region
      $region9: #{embeddings_forward.1} parent=5 // pred_check
        _
      $region10: #{embeddings_forward.1} parent=5 // pred_check_branch
        %119 = sbr.rel (%p116) target = $region12
      $region11: #{embeddings_forward.1} parent=5 // pred_region
        %s120 = ssub.s32 %s12, 1
        // Predicated region
        $region13: #{embeddings_forward.1} parent=11 // pred_check
          %p121 = pneg %p59
        $region14: #{embeddings_forward.1} parent=11 // pred_check_branch
          %123 = sbr.rel (%p121) target = $region16
        $region15: #{embeddings_forward.1} parent=11 // pred_region
          _
        $region16: #{embeddings_forward.1} parent=11 // pred_fallthru
          _
        // Predicated region
        $region17: #{embeddings_forward.1} parent=11 // pred_check
          %p124 = pneg %p80
        $region18: #{embeddings_forward.1} parent=11 // pred_check_branch
          %126 = sbr.rel (%p124) target = $region20
        $region19: #{embeddings_forward.1} parent=11 // pred_region
          _
        $region20: #{embeddings_forward.1} parent=11 // pred_fallthru
          _
      $region12: #{embeddings_forward.1} parent=5 // pred_fallthru
        _
      %p127 = scmp.lt.s32.totalorder %s12, 2
      // Predicated region
      $region21: #{embeddings_forward.1} parent=5 // pred_check
        %p128 = pneg %p127
      $region22: #{embeddings_forward.1} parent=5 // pred_check_branch
        %130 = sbr.rel (%p128) target = $region24
      $region23: #{embeddings_forward.1} parent=5 // pred_region
        // Predicated region
        $region25: #{embeddings_forward.1} parent=23 // pred_check
          %p131 = pneg %p32
        $region26: #{embeddings_forward.1} parent=23 // pred_check_branch
          %133 = sbr.rel (%p131) target = $region28
        $region27: #{embeddings_forward.1} parent=23 // pred_region
          %s134 = smul.u32 2, %s12
          %p135 = scmp.lt.s32.totalorder %s134, 3
          %s136 = scalar_select %p135, %s134, 3
          %s137 = smul.addr %s136, 8
          %s138 = scalar_lea.vmem %s0, %s137
          %s139 = smul.u32 2, %s12
        $region28: #{embeddings_forward.1} parent=23 // pred_fallthru
          _
      $region24: #{embeddings_forward.1} parent=5 // pred_fallthru
        _
      %p140 = scmp.le.s32.totalorder 1, %s12
      %p141 = scmp.lt.s32.totalorder %s12, 3
      %p142 = pnand %p140, %p141
      %p143 = pneg %p142
      // Predicated region
      $region29: #{embeddings_forward.1} parent=5 // pred_check
        _
      $region30: #{embeddings_forward.1} parent=5 // pred_check_branch
        %145 = sbr.rel (%p142) target = $region32
      $region31: #{embeddings_forward.1} parent=5 // pred_region
        %s146 = ssub.s32 %s12, 1
        %s147 = smul.u32 2, %s17
        %p148 = scmp.lt.s32.totalorder %s147, 3
        %s149 = scalar_select %p148, %s147, 3
        %s150 = smul.addr %s149, 8
        %s151 = scalar_lea.vmem %s0, %s150
        %p152 = pneg %p38
        %p153 = pneg %p35
        %p154 = pneg %p59
        %p155 = pneg %p56
        %p156 = pneg %p80
        %p157 = pneg %p77
        %p158 = pneg %p106
        %p159 = pneg %p103
        %s160 = sand.u32 %s93, 1
        %s161 = scalar_lea.sflag [#allocation3], %s160
        %s162 = sand.u32 %s93, 1
        %s163 = smul.addr %s162, 16
        %s164 = scalar_lea.vmem [#allocation2], %s163
        %s165 = smul.u32 2, %s17
        %p166 = scmp.lt.s32.totalorder %s165, 3
        %s167 = scalar_select %p166, %s165, 3
        %s168 = smul.addr %s167, 8
        %s169 = scalar_lea.vmem %s0, %s168
        %s170 = smul.u32 2, %s17
        %s171 = smul.u32 2, %s17
        %v172 = vld [vmem:[%s169] sm:$0xff]
        %v173 = vld [vmem:[%s169 + $0x8] sm:$0xff]
        %v174 = vld [vmem:[%s1] sm:$0xff]
        %v175 = vld [vmem:[%s1 + $0x8] sm:$0xff]
        %v176 = vld [vmem:[%s1 + $0x10] sm:$0xff]
        %v177 = vld [vmem:[%s1 + $0x18] sm:$0xff]
        %v178 = vld [vmem:[%s1 + $0x20] sm:$0xff]
        %v179 = vld [vmem:[%s1 + $0x28] sm:$0xff]
        %v180 = vld [vmem:[%s1 + $0x30] sm:$0xff]
        %v181 = vld [vmem:[%s1 + $0x38] sm:$0xff]
        %v182 = vld [vmem:[%s1 + $0x40] sm:$0xff]
        %v183 = vld [vmem:[%s1 + $0x48] sm:$0xff]
        %v184 = vld [vmem:[%s1 + $0x50] sm:$0xff]
        %v185 = vld [vmem:[%s1 + $0x58] sm:$0xff]
        %v186 = vld [vmem:[%s1 + $0x60] sm:$0xff]
        %v187 = vld [vmem:[%s1 + $0x68] sm:$0xff]
        %v188 = vld [vmem:[%s1 + $0x70] sm:$0xff]
        %v189 = vld [vmem:[%s1 + $0x78] sm:$0xff]
        %v190 = vld [vmem:[%s2] sm:$0xff]
        %v191 = vld [vmem:[%s2 + $0x8] sm:$0xff]
        %192 = vmatprep.subr.mxu0 0.0
        %193 = vmatpush1.msra.mxu0 %v174
        %194 = vmatprep.subr.mxu0 0.0
        %195 = vmatpush1.msra.mxu0 %v175
        %196 = vmatprep.subr.mxu0 0.0
        %197 = vmatpush1.msra.mxu0 %v176
        %198 = vmatprep.subr.mxu0 0.0
        %199 = vmatpush1.msra.mxu0 %v177
        %200 = vmatprep.subr.mxu0 0.0
        %201 = vmatpush1.msra.mxu0 %v178
        %202 = vmatprep.subr.mxu0 0.0
        %203 = vmatpush1.msra.mxu0 %v179
        %204 = vmatprep.subr.mxu0 0.0
        %205 = vmatpush1.msra.mxu0 %v180
        %206 = vmatprep.subr.mxu0 0.0
        %207 = vmatpush1.msra.mxu0 %v181
        %208 = vmatprep.subr.mxu0 0.0
        %209 = vmatpush1.msra.mxu0 %v182
        %210 = vmatprep.subr.mxu0 0.0
        %211 = vmatpush1.msra.mxu0 %v183
        %212 = vmatprep.subr.mxu0 0.0
        %213 = vmatpush1.msra.mxu0 %v184
        %214 = vmatprep.subr.mxu0 0.0
        %215 = vmatpush1.msra.mxu0 %v185
        %216 = vmatprep.subr.mxu0 0.0
        %217 = vmatpush1.msra.mxu0 %v186
        %218 = vmatprep.subr.mxu0 0.0
        %219 = vmatpush1.msra.mxu0 %v187
        %220 = vmatprep.subr.mxu0 0.0
        %221 = vmatpush1.msra.mxu0 %v188
        %222 = vmatprep.subr.mxu0 0.0
        %223 = vmatpush1.msra.mxu0 %v189
        %224 = vmatprep.subr.mxu0 0.0
        %225 = vmatpush1.msra.mxu0 0.0
        %226 = vmatprep.subr.mxu0 0.0
        %227 = vmatpush1.msra.mxu0 0.0
        %228 = vmatprep.subr.mxu0 0.0
        %229 = vmatpush1.msra.mxu0 0.0
        %230 = vmatprep.subr.mxu0 0.0
        %231 = vmatpush1.msra.mxu0 0.0
        %232 = vmatprep.subr.mxu0 0.0
        %233 = vmatpush1.msra.mxu0 0.0
        %234 = vmatprep.subr.mxu0 0.0
        %235 = vmatpush1.msra.mxu0 0.0
        %236 = vmatprep.subr.mxu0 0.0
        %237 = vmatpush1.msra.mxu0 0.0
        %238 = vmatprep.subr.mxu0 0.0
        %239 = vmatpush1.msra.mxu0 0.0
        %240 = vmatprep.subr.mxu0 0.0
        %241 = vmatpush1.msra.mxu0 0.0
        %242 = vmatprep.subr.mxu0 0.0
        %243 = vmatpush1.msra.mxu0 0.0
        %244 = vmatprep.subr.mxu0 0.0
        %245 = vmatpush1.msra.mxu0 0.0
        %246 = vmatprep.subr.mxu0 0.0
        %247 = vmatpush1.msra.mxu0 0.0
        %248 = vmatprep.subr.mxu0 0.0
        %249 = vmatpush1.msra.mxu0 0.0
        %250 = vmatprep.subr.mxu0 0.0
        %251 = vmatpush1.msra.mxu0 0.0
        %252 = vmatprep.subr.mxu0 0.0
        %253 = vmatpush1.msra.mxu0 0.0
        %254 = vmatprep.subr.mxu0 0.0
        %255 = vmatpush1.msra.mxu0 0.0
        %256 = vmatprep.mubr.f32.mxu0 0.0
        %257 = vmatmul.mubr.f32.gmra.mrb[0].mxu0 %v172
        %v258 = vpop.f32.mrb[0].mxu0
        %v259 = vadd.f32 %v190, %v258
        %v260 = vpop.f32.mrb[0].mxu0
        %261 = vmatprep.mubr.f32.mxu0 0.0
        %262 = vmatmul.mubr.f32.gmra.mrb[0].mxu0 %v173
        %v263 = vpop.f32.mrb[0].mxu0
        %v264 = vadd.f32 %v191, %v263
        %v265 = vpop.f32.mrb[0].mxu0
        %266 = vdwg.mxu0
        %267 = vst [vmem:[%s164] sm:$0xff] %v259
        %268 = vst [vmem:[%s164 + $0x8] sm:$0xff] %v264
        %s269 = sand.u32 %s93, 1
        %s270 = scalar_lea.sflag [#allocation3], %s269
        %s271 = sand.u32 %s93, 1
        %s272 = smul.addr %s271, 16
        %s273 = scalar_lea.vmem [#allocation2], %s272
        // Predicated region
        $region33: #{embeddings_forward.1} parent=31 // pred_check
          %p274 = pneg %p103
        $region34: #{embeddings_forward.1} parent=31 // pred_check_branch
          %276 = sbr.rel (%p274) target = $region36
        $region35: #{embeddings_forward.1} parent=31 // pred_region
          %s277 = smul.u32 2, %s17
          %s279 = ssub.s32 256, 256
          %280 = vsyncadd %s270, %s279
          %s281 = smul.addr %s277, 128
          %s282 = scalar_lea.hbm %s3, %s281
          %s283 = sshll.u32 %s273, 4
          %s284 = int_to_ptr.vmem [resolvable:$true] %s283
          %289 = dma.vmem_to_hbm [thread:$0]  %s284, 256, %s282, %s270, 128, 128, 8
        $region36: #{embeddings_forward.1} parent=31 // pred_fallthru
          _
      $region32: #{embeddings_forward.1} parent=5 // pred_fallthru
        _
      %p290 = scmp.le.s32.totalorder 2, %s12
      // Predicated region
      $region37: #{embeddings_forward.1} parent=5 // pred_check
        %p291 = pneg %p290
      $region38: #{embeddings_forward.1} parent=5 // pred_check_branch
        %293 = sbr.rel (%p291) target = $region40
      $region39: #{embeddings_forward.1} parent=5 // pred_region
        %s294 = ssub.s32 %s12, 2
        // Predicated region
        $region41: #{embeddings_forward.1} parent=39 // pred_check
          %p295 = pneg %p109
        $region42: #{embeddings_forward.1} parent=39 // pred_check_branch
          %297 = sbr.rel (%p295) target = $region44
        $region43: #{embeddings_forward.1} parent=39 // pred_region
          %s298 = sand.u32 %s94, 1
          %s299 = scalar_lea.sflag [#allocation3], %s298
          %s300 = sand.u32 %s94, 1
          %s301 = smul.addr %s300, 16
          %s302 = scalar_lea.vmem [#allocation2], %s301
          %303 = dma.done %s299, 256
        $region44: #{embeddings_forward.1} parent=39 // pred_fallthru
          _
      $region40: #{embeddings_forward.1} parent=5 // pred_fallthru
        _
    $region6: #{embeddings_forward.1} parent=1 // loop_footer
      %s16 = sadd.s32 1, %s12
    $region7: #{embeddings_forward.1} parent=1 // loop_footer_branch
      %11 = sbr.rel target = $region3
    $region8: #{embeddings_forward.1} parent=1 // loop_exit
      _
    %304 = vsyncpa [#allocation3], 1
    %s305 = scalar_lea.sflag [#allocation3], 1
    %306 = vsyncpa %s305, 1

</llo_original>
